<compile_context>
chip_gen: v5e
topology: v5e:2x2
jax: 0.10.0
libtpu: 0.0.40
codegen_flags: <defaults>
</compile_context>

<pallas_src>
import jax
import jax.numpy as jnp
from jax.experimental import pallas as pl
from jax.experimental.pallas import tpu as pltpu


def focus_matmul_kernel(x_ref, w_ref, b_ref, o_ref):
    # x_ref: (K, TILE_M)   channel-major activation tile (K = 4*C1 on sublanes,
    #                      pixels on lanes)
    # w_ref: (C2, K)       1x1 conv weight (== torch (c2, 4c1, 1, 1) squeezed)
    # b_ref: (C2, 1)       bias, broadcast along lanes in-register
    # o_ref: (C2, TILE_M)  lane-dense output tile (already NCHW-flat)
    acc = jnp.dot(w_ref[...], x_ref[...], preferred_element_type=jnp.float32)
    acc = acc + b_ref[...].astype(jnp.float32)
    o_ref[...] = acc.astype(o_ref.dtype)


def focus_forward(x, w, b, *, max_tile_m=16384):
    """Focus forward pass (space-to-depth + 1x1 conv + bias). NCHW in / NCHW out.

    x: (B, C1, H, W)    w: (C2, 4*C1)    b: (C2,)
    """
    B, C1, H, W = x.shape
    C2, K = w.shape
    assert K == 4 * C1, (K, C1)
    assert H % 2 == 0 and W % 2 == 0, (H, W)

    # Space-to-depth slices; concat order matches torch.cat in Focus.forward.
    # Channel-major throughout -- XLA fuses the 4 strided slices + concat into
    # a single copy pass; the reshape that flattens (H2, W2) is free.
    tl = x[:, :, ::2, ::2]
    bl = x[:, :, 1::2, ::2]
    tr = x[:, :, ::2, 1::2]
    br = x[:, :, 1::2, 1::2]
    xc = jnp.concatenate([tl, bl, tr, br], axis=1)      # (B, 4*C1, H/2, W/2)
    H2, W2 = H // 2, W // 2
    M = H2 * W2
    xm = xc.reshape(B, K, M)                            # pixels -> lanes
    b2 = b.reshape(C2, 1)

    # Tile the pixel (lane) axis; a single full-extent block if small, else an
    # aligned tile sized for comfortable double-buffering on v5e/v6e/v7x VMEM.
    tile_m = M if M <= max_tile_m else max_tile_m       # max_tile_m % 128 == 0
    grid = (B, pl.cdiv(M, tile_m))

    itemsize = x.dtype.itemsize
    cost = pl.CostEstimate(
        flops=int(2 * B * M * K * C2),
        transcendentals=0,
        bytes_accessed=int(
            B * K * M * itemsize            # activations in
            + C2 * K * w.dtype.itemsize     # weight
            + C2 * b.dtype.itemsize         # bias
            + B * C2 * M * itemsize         # output
        ),
    )

    out_flat = pl.pallas_call(
        focus_matmul_kernel,
        out_shape=jax.ShapeDtypeStruct((B, C2, M), x.dtype),
        grid=grid,
        in_specs=[
            # Activation tile: batch squeezed, full K on sublanes, tile_m lanes.
            pl.BlockSpec((None, K, tile_m), lambda bi, mi: (bi, 0, mi)),
            # Weight and bias: resident (constant block index).
            pl.BlockSpec((C2, K), lambda bi, mi: (0, 0)),
            pl.BlockSpec((C2, 1), lambda bi, mi: (0, 0)),
        ],
        out_specs=pl.BlockSpec((None, C2, tile_m), lambda bi, mi: (bi, 0, mi)),
        compiler_params=pltpu.CompilerParams(
            dimension_semantics=("parallel", "parallel"),
        ),
        cost_estimate=cost,
    )(xm, w, b2)

    # (B, C2, M) is already NCHW-flat -> just split the spatial axis back out.
    return out_flat.reshape(B, C2, H2, W2)


if __name__ == "__main__":
    # Module config: Focus(c1=4, c2=8) with defaults k=1, s=1, p=0, g=1, act=True (bias).
    c1, c2 = 4, 8
    B, H, W = 2, 16, 16

    key = jax.random.PRNGKey(0)
    kx, kw, kb = jax.random.split(key, 3)

    x = jax.random.normal(kx, (B, c1, H, W), dtype=jnp.float32)
    # torch Conv2d weight is (c2, 4*c1, 1, 1); we store it squeezed as (c2, 4*c1).
    w = jax.random.normal(kw, (c2, 4 * c1), dtype=jnp.float32) * 0.1
    b = jax.random.normal(kb, (c2,), dtype=jnp.float32) * 0.1

    out = jax.block_until_ready(focus_forward(x, w, b))
    assert out.shape == (B, c2, H // 2, W // 2), out.shape

    # Pure-JAX reference of the same math (space-to-depth + 1x1 conv + bias).
    tl = x[:, :, ::2, ::2]
    bl = x[:, :, 1::2, ::2]
    tr = x[:, :, ::2, 1::2]
    br = x[:, :, 1::2, 1::2]
    xc = jnp.concatenate([tl, bl, tr, br], axis=1)
    ref = jnp.einsum("nk,bkhw->bnhw", w, xc) + b[None, :, None, None]
    assert jnp.allclose(out, ref, atol=1e-4, rtol=1e-4)

    print("KERNEL_OK")
</pallas_src>

<mosaic_0001>
module attributes {stable_mosaic.version = 11 : i64} {
  func.func @focus_matmul_kernel(%arg0: i32, %arg1: i32, %arg2: memref<1x16x64xf32, #tpu.memory_space<vmem>>, %arg3: memref<8x16xf32, #tpu.memory_space<vmem>>, %arg4: memref<8x1xf32, #tpu.memory_space<vmem>>, %arg5: memref<1x8x64xf32, #tpu.memory_space<vmem>>) attributes {dimension_semantics = [#tpu.dimension_semantics<parallel>, #tpu.dimension_semantics<parallel>], iteration_bounds = array<i64: 2, 1>, scalar_prefetch = 0 : i64, scratch_operands = 0 : i64, tpu.core_type = #tpu.core_type<tc>, window_params = [{transform_indices = @transform_0, window_bounds = array<i64: 1, 16, 64>}, {pipeline_mode = #tpu.pipeline_mode<synchronous>, transform_indices = @transform_1, window_bounds = array<i64: 8, 16>}, {pipeline_mode = #tpu.pipeline_mode<synchronous>, transform_indices = @transform_2, window_bounds = array<i64: 8, 1>}, {transform_indices = @transform_3, window_bounds = array<i64: 1, 8, 64>}]} {
    %c0 = arith.constant 0 : index
    %c0_0 = arith.constant 0 : index
    %0 = vector.load %arg3[%c0, %c0_0] : memref<8x16xf32, #tpu.memory_space<vmem>>, vector<8x16xf32>
    %c0_1 = arith.constant 0 : index
    %c0_2 = arith.constant 0 : index
    %c0_3 = arith.constant 0 : index
    %1 = vector.load %arg2[%c0_1, %c0_2, %c0_3] : memref<1x16x64xf32, #tpu.memory_space<vmem>>, vector<1x16x64xf32>
    %2 = vector.shape_cast %1 : vector<1x16x64xf32> to vector<16x64xf32>
    %cst = arith.constant dense<0.000000e+00> : vector<8x64xf32>
    %3 = tpu.matmul %0, %2, %cst {dimension_numbers = #tpu.dot_dimension_numbers<[1], [0], [0], [1], [0, 0, 1, 1], [], []>} : vector<8x16xf32>, vector<16x64xf32>, vector<8x64xf32> -> vector<8x64xf32>
    %c0_4 = arith.constant 0 : index
    %c0_5 = arith.constant 0 : index
    %4 = vector.load %arg4[%c0_4, %c0_5] : memref<8x1xf32, #tpu.memory_space<vmem>>, vector<8x1xf32>
    %5 = vector.broadcast %4 : vector<8x1xf32> to vector<8x64xf32>
    %6 = arith.addf %3, %5 : vector<8x64xf32>
    %c0_6 = arith.constant 0 : index
    %c0_7 = arith.constant 0 : index
    %c0_8 = arith.constant 0 : index
    %7 = vector.load %arg5[%c0_6, %c0_7, %c0_8] : memref<1x8x64xf32, #tpu.memory_space<vmem>>, vector<1x8x64xf32>
    %8 = vector.shape_cast %7 : vector<1x8x64xf32> to vector<8x64xf32>
    %9 = vector.shape_cast %6 : vector<8x64xf32> to vector<1x8x64xf32>
    tpu.vector_store %arg5[%c0_6, %c0_7, %c0_8], %9 {strides = array<i32>} : memref<1x8x64xf32, #tpu.memory_space<vmem>>, vector<1x8x64xf32>,
    return
  }
  func.func @transform_0(%arg0: i32, %arg1: i32) -> (i32, i32, i32) {
    %c0_i32 = arith.constant 0 : i32
    %c0_i32_0 = arith.constant 0 : i32
    return %arg0, %c0_i32, %arg1 : i32, i32, i32
  }
  func.func @transform_1(%arg0: i32, %arg1: i32) -> (i32, i32) {
    %c0_i32 = arith.constant 0 : i32
    %c0_i32_0 = arith.constant 0 : i32
    %c0_i32_1 = arith.constant 0 : i32
    return %c0_i32, %c0_i32_0 : i32, i32
  }
  func.func @transform_2(%arg0: i32, %arg1: i32) -> (i32, i32) {
    %c0_i32 = arith.constant 0 : i32
    %c0_i32_0 = arith.constant 0 : i32
    %c0_i32_1 = arith.constant 0 : i32
    return %c0_i32, %c0_i32_0 : i32, i32
  }
  func.func @transform_3(%arg0: i32, %arg1: i32) -> (i32, i32, i32) {
    %c0_i32 = arith.constant 0 : i32
    %c0_i32_0 = arith.constant 0 : i32
    return %arg0, %c0_i32, %arg1 : i32, i32, i32
  }
}

</mosaic_0001>

<llo_original>
// kernel: tpu_custom_call.1
$region0: #{tpu_custom_call.1}
  #allocation0 [shape = 'u32[]', space=smem, size = 0x4, offset = 0x4, fixed_abs, tag = 'smem constant byte address 0x4 - core index']
  #allocation1 [shape = 'u32[72,128]{1,0:T(1,128)}', space=vmem, size = 0x9000, scoped, tag = 'internal scratch']
  %s0 = inlined_call_operand.hbm [shape: f32[2,16,64], index: 0, kind: input, shape index: {}]
  %s1 = inlined_call_operand.vmem [shape: f32[8,16], index: 1, kind: input, shape index: {}]
  %s2 = inlined_call_operand.vmem [shape: f32[8,1], index: 2, kind: input, shape index: {}]
  %s3 = inlined_call_operand.hbm [shape: f32[2,8,64], index: 3, kind: output, shape index: {}]
  %s4 = sld [smem:[#allocation0]]
  $region49: #{tpu_custom_call.1} parent=0
    _
  %s6 = ssub.s32 1, %s4
  %s7 = scalar_select 0, %s6, %s4
  $region1: #{tpu_custom_call.1} parent=0
    #allocation2 [shape = 'u8[16384]{0}', space=vmem, size = 0x4000, scoped, tag = 'input window, operand 0']
    #allocation3 [shape = 's32[2]{0}', space=sflag, size = 0x8, scoped, tag = 'scoped memory for tpu_custom_call.1']
    #allocation4 [shape = 's32[2]{0}', space=sflag, size = 0x8, scoped, tag = 'scoped memory for tpu_custom_call.1']
    #allocation5 [shape = 'u8[8192]{0}', space=vmem, size = 0x2000, scoped, tag = 'output window, operand 0']
    %8 = vsyncpa [#allocation3], 0
    %s9 = scalar_lea.sflag [#allocation3], 1
    %10 = vsyncpa %s9, 0
    %11 = vsyncpa [#allocation4], 0
    %s12 = scalar_lea.sflag [#allocation4], 1
    %13 = vsyncpa %s12, 0
    loop: start=0, step=1, limit=4
    $region2: #{tpu_custom_call.1} parent=1 // loop_pre_header
      _
    $region3: #{tpu_custom_call.1} parent=1 // loop_header
      %s15 = sphi 0, %s19
      %p16 = scmp.ge.s32.totalorder %s15, 4
      %s22 = sphi 0, %s34
      %s23 = sphi 0, %s30
      %s24 = sphi 0, %s22
      %s25 = sphi 0, %s23
      %s26 = sphi 0, %s24
      %s27 = sphi 0, %s25
      %s39 = sphi 0, %s41
      %s42 = sphi 0, %s39
      %s43 = sphi 0, %s42
      %s59 = sphi 0, %s43
      %s63 = sphi 0, %s63
      %s65 = sphi 0, %s63
      %s66 = sphi 0, %s65
      %s80 = sphi 0, %s66
      %s84 = sphi 0, %s84
      %s86 = sphi 0, %s84
      %s87 = sphi 0, %s86
      %s101 = sphi 0, %s87
      %s109 = sphi 0, %s111
      %s112 = sphi 0, %s109
      %s113 = sphi 0, %s112
      %s129 = sphi 0, %s113
    $region4: #{tpu_custom_call.1} parent=1 // loop_header_branch
      %18 = sbr.rel (%p16) target = $region8
    $region5: #{tpu_custom_call.1} parent=1 // loop_body
      %s20 = ssub.s32 %s15, 1
      %s21 = ssub.s32 %s15, 2
      %s28 = sadd.s32 1, %s23
      %p29 = scmp.ge.s32.totalorder %s28, 1
      %s30 = scalar_select %p29, 0, %s28
      %s31 = sadd.s32 1, %s22
      %s32 = scalar_select %p29, %s31, %s22
      %p33 = scmp.ge.s32.totalorder %s32, 2
      %s34 = scalar_select %p33, 0, %s32
      %s35 = ssub.s32 %s22, %s34
      %s36 = ssub.s32 %s23, %s30
      %s37 = sor.u32 %s35, %s36
      %p38 = scmp.eq.s32.totalorder %s37, 0
      %s40 = sadd.s32 %s39, 1
      %s41 = scalar_select %p38, %s39, %s40
      %p44 = pneg %p38
      %p45 = scmp.eq.s32.totalorder %s15, 1
      %p46 = por %p44, %p45
      %p47 = scmp.ne.s32.totalorder %s39, %s42
      %p48 = scmp.eq.s32.totalorder %s15, 0
      %p49 = por %p47, %p48
      %p50 = scmp.ne.s32.totalorder %s39, %s42
      %p51 = scmp.eq.s32.totalorder %s20, 1
      %p52 = por %p50, %p51
      %p53 = scmp.ne.s32.totalorder %s42, %s43
      %p54 = scmp.eq.s32.totalorder %s20, 0
      %p55 = por %p53, %p54
      %p56 = scmp.ne.s32.totalorder %s42, %s43
      %p57 = scmp.eq.s32.totalorder %s21, 1
      %p58 = por %p56, %p57
      %p60 = scmp.ne.s32.totalorder %s43, %s59
      %p61 = scmp.eq.s32.totalorder %s21, 0
      %p62 = por %p60, %p61
      %s64 = sadd.s32 %s63, 1
      %p67 = scmp.eq.s32.totalorder %s15, 1
      %p68 = scmp.ne.s32.totalorder %s63, %s65
      %p69 = scmp.eq.s32.totalorder %s15, 0
      %p70 = por %p68, %p69
      %p71 = scmp.ne.s32.totalorder %s63, %s65
      %p72 = scmp.eq.s32.totalorder %s20, 1
      %p73 = por %p71, %p72
      %p74 = scmp.ne.s32.totalorder %s65, %s66
      %p75 = scmp.eq.s32.totalorder %s20, 0
      %p76 = por %p74, %p75
      %p77 = scmp.ne.s32.totalorder %s65, %s66
      %p78 = scmp.eq.s32.totalorder %s21, 1
      %p79 = por %p77, %p78
      %p81 = scmp.ne.s32.totalorder %s66, %s80
      %p82 = scmp.eq.s32.totalorder %s21, 0
      %p83 = por %p81, %p82
      %s85 = sadd.s32 %s84, 1
      %p88 = scmp.eq.s32.totalorder %s15, 1
      %p89 = scmp.ne.s32.totalorder %s84, %s86
      %p90 = scmp.eq.s32.totalorder %s15, 0
      %p91 = por %p89, %p90
      %p92 = scmp.ne.s32.totalorder %s84, %s86
      %p93 = scmp.eq.s32.totalorder %s20, 1
      %p94 = por %p92, %p93
      %p95 = scmp.ne.s32.totalorder %s86, %s87
      %p96 = scmp.eq.s32.totalorder %s20, 0
      %p97 = por %p95, %p96
      %p98 = scmp.ne.s32.totalorder %s86, %s87
      %p99 = scmp.eq.s32.totalorder %s21, 1
      %p100 = por %p98, %p99
      %p102 = scmp.ne.s32.totalorder %s87, %s101
      %p103 = scmp.eq.s32.totalorder %s21, 0
      %p104 = por %p102, %p103
      %s105 = ssub.s32 %s22, %s34
      %s106 = ssub.s32 %s23, %s30
      %s107 = sor.u32 %s105, %s106
      %p108 = scmp.eq.s32.totalorder %s107, 0
      %s110 = sadd.s32 %s109, 1
      %s111 = scalar_select %p108, %s109, %s110
      %p114 = pneg %p108
      %p115 = scmp.eq.s32.totalorder %s15, 1
      %p116 = por %p114, %p115
      %p117 = scmp.ne.s32.totalorder %s109, %s112
      %p118 = scmp.eq.s32.totalorder %s15, 0
      %p119 = por %p117, %p118
      %p120 = scmp.ne.s32.totalorder %s109, %s112
      %p121 = scmp.eq.s32.totalorder %s20, 1
      %p122 = por %p120, %p121
      %p123 = scmp.ne.s32.totalorder %s112, %s113
      %p124 = scmp.eq.s32.totalorder %s20, 0
      %p125 = por %p123, %p124
      %p126 = scmp.ne.s32.totalorder %s112, %s113
      %p127 = scmp.eq.s32.totalorder %s21, 1
      %p128 = por %p126, %p127
      %p130 = scmp.ne.s32.totalorder %s113, %s129
      %p131 = scmp.eq.s32.totalorder %s21, 0
      %p132 = por %p130, %p131
      %p133 = scmp.le.s32.totalorder 1, %s15
      %p134 = scmp.lt.s32.totalorder %s15, 3
      %p135 = pnand %p133, %p134
      %p136 = pneg %p135
      // Predicated region
      $region9: #{tpu_custom_call.1} parent=5 // pred_check
        _
      $region10: #{tpu_custom_call.1} parent=5 // pred_check_branch
        %138 = sbr.rel (%p135) target = $region12
      $region11: #{tpu_custom_call.1} parent=5 // pred_region
        %s139 = ssub.s32 %s15, 1
        // Predicated region
        $region13: #{tpu_custom_call.1} parent=11 // pred_check
          %p140 = pneg %p76
        $region14: #{tpu_custom_call.1} parent=11 // pred_check_branch
          %142 = sbr.rel (%p140) target = $region16
        $region15: #{tpu_custom_call.1} parent=11 // pred_region
          _
        $region16: #{tpu_custom_call.1} parent=11 // pred_fallthru
          _
        // Predicated region
        $region17: #{tpu_custom_call.1} parent=11 // pred_check
          %p143 = pneg %p97
        $region18: #{tpu_custom_call.1} parent=11 // pred_check_branch
          %145 = sbr.rel (%p143) target = $region20
        $region19: #{tpu_custom_call.1} parent=11 // pred_region
          _
        $region20: #{tpu_custom_call.1} parent=11 // pred_fallthru
          _
      $region12: #{tpu_custom_call.1} parent=5 // pred_fallthru
        _
      %p146 = scmp.lt.s32.totalorder %s15, 2
      // Predicated region
      $region21: #{tpu_custom_call.1} parent=5 // pred_check
        %p147 = pneg %p146
      $region22: #{tpu_custom_call.1} parent=5 // pred_check_branch
        %149 = sbr.rel (%p147) target = $region24
      $region23: #{tpu_custom_call.1} parent=5 // pred_region
        // Predicated region
        $region25: #{tpu_custom_call.1} parent=23 // pred_check
          %p150 = pneg %p49
        $region26: #{tpu_custom_call.1} parent=23 // pred_check_branch
          %152 = sbr.rel (%p150) target = $region28
        $region27: #{tpu_custom_call.1} parent=23 // pred_region
          %s153 = sand.u32 %s39, 1
          %s154 = scalar_lea.sflag [#allocation3], %s153
          %s155 = sand.u32 %s39, 1
          %s156 = smul.addr %s155, 16
          %s157 = scalar_lea.vmem [#allocation2], %s156
          %159 = vsyncadd %s154, 0
          %s160 = smul.addr %s22, 2
          %s161 = sadd.s32 %s23, %s160
          %s162 = smul.addr %s161, 8
          %s163 = scalar_lea.hbm %s0, %s162
          %s164 = sshll.u32 %s163, 4
          %s165 = int_to_ptr.hbm [resolvable:$true] %s164
          %s166 = sshll.u32 %s157, 4
          %s167 = int_to_ptr.vmem [resolvable:$true] %s166
          %172 = dma.hbm_to_vmem [thread:$0]  %s165, 256, %s167, %s154, 128, 128, 8
        $region28: #{tpu_custom_call.1} parent=23 // pred_fallthru
          _
      $region24: #{tpu_custom_call.1} parent=5 // pred_fallthru
        _
      %p173 = scmp.le.s32.totalorder 1, %s15
      %p174 = scmp.lt.s32.totalorder %s15, 3
      %p175 = pnand %p173, %p174
      %p176 = pneg %p175
      // Predicated region
      $region29: #{tpu_custom_call.1} parent=5 // pred_check
        _
      $region30: #{tpu_custom_call.1} parent=5 // pred_check_branch
        %178 = sbr.rel (%p175) target = $region32
      $region31: #{tpu_custom_call.1} parent=5 // pred_region
        %s179 = ssub.s32 %s15, 1
        %s180 = sand.u32 %s42, 1
        %s181 = scalar_lea.sflag [#allocation3], %s180
        %s182 = sand.u32 %s42, 1
        %s183 = smul.addr %s182, 16
        %s184 = scalar_lea.vmem [#allocation2], %s183
        // Predicated region
        $region33: #{tpu_custom_call.1} parent=31 // pred_check
          %p185 = pneg %p55
        $region34: #{tpu_custom_call.1} parent=31 // pred_check_branch
          %187 = sbr.rel (%p185) target = $region36
        $region35: #{tpu_custom_call.1} parent=31 // pred_region
          %189 = dma.done %s181, 256
        $region36: #{tpu_custom_call.1} parent=31 // pred_fallthru
          _
        %s190 = sand.u32 %s42, 1
        %s191 = scalar_lea.sflag [#allocation3], %s190
        %s192 = sand.u32 %s42, 1
        %s193 = smul.addr %s192, 16
        %s194 = scalar_lea.vmem [#allocation2], %s193
        %p195 = pneg %p55
        %p196 = pneg %p52
        %p197 = pneg %p76
        %p198 = pneg %p73
        %p199 = pneg %p97
        %p200 = pneg %p94
        %p201 = pneg %p125
        %p202 = pneg %p122
        %s203 = sand.u32 %s112, 1
        %s204 = scalar_lea.sflag [#allocation4], %s203
        %s205 = sand.u32 %s112, 1
        %s206 = smul.addr %s205, 8
        %s207 = scalar_lea.vmem [#allocation5], %s206
        %v208 = vld [vmem:[%s1] sm:$0xff]
        %v209 = vld [vmem:[%s184] sm:$0xff]
        %v210 = vld [vmem:[%s184 + $0x8] sm:$0xff]
        %v211 = vld [vmem:[%s2] sm:$0xff]
        %213 = vset.pattern.permute.xlu0 0
        %214 = vperm.xlu0 %213, %v211
        %v215 = vpop.permute.xlu0 %214
        %vm217 = vcmask 130048
        %v219 = vsel %vm217, %v208, 0
        %221 = vmatpush.msra.mxu0 0.0
        %222 = vmatpush.msra.mxu0 0.0
        %223 = vmatpush.msra.mxu0 0.0
        %224 = vmatpush.msra.mxu0 0.0
        %225 = vmatpush.msra.mxu0 0.0
        %226 = vmatpush.msra.mxu0 0.0
        %227 = vmatpush.msra.mxu0 0.0
        %228 = vmatpush.msra.mxu0 0.0
        %229 = vmatpush.msra.mxu0 0.0
        %230 = vmatpush.msra.mxu0 0.0
        %231 = vmatpush.msra.mxu0 0.0
        %232 = vmatpush.msra.mxu0 0.0
        %233 = vmatpush.msra.mxu0 0.0
        %234 = vmatpush.msra.mxu0 0.0
        %235 = vmatpush.msra.mxu0 %v210
        %236 = vmatpush.msra.mxu0 %v209
        %237 = vmatmul.f32.gmra.mxu0 %v219
        %v238 = vpop.f32.mrf.mxu0
        %v239 = vadd.f32 %v215, %v238
        %240 = vdwg.mxu0
        %vm241 = vcmask 523264
        %242 = vst.msk [vmem:[%s207] sm:$0xff] %vm241, %v239
        %s243 = sand.u32 %s112, 1
        %s244 = scalar_lea.sflag [#allocation4], %s243
        %s245 = sand.u32 %s112, 1
        %s246 = smul.addr %s245, 8
        %s247 = scalar_lea.vmem [#allocation5], %s246
        // Predicated region
        $region37: #{tpu_custom_call.1} parent=31 // pred_check
          %p248 = pneg %p122
        $region38: #{tpu_custom_call.1} parent=31 // pred_check_branch
          %250 = sbr.rel (%p248) target = $region40
        $region39: #{tpu_custom_call.1} parent=31 // pred_region
          %252 = vsyncadd %s244, 0
          %s253 = sadd.s32 %s25, %s24
          %s254 = smul.addr %s253, 8
          %s255 = scalar_lea.hbm %s3, %s254
          %s257 = sshll.u32 %s247, 4
          %s258 = int_to_ptr.vmem [resolvable:$true] %s257
          %s259 = sshll.u32 %s255, 4
          %s260 = int_to_ptr.hbm [resolvable:$true] %s259
          %262 = dma.vmem_to_hbm [thread:$0]  %s258, 128, %s260, %s244
        $region40: #{tpu_custom_call.1} parent=31 // pred_fallthru
          _
      $region32: #{tpu_custom_call.1} parent=5 // pred_fallthru
        _
      %p263 = scmp.le.s32.totalorder 2, %s15
      // Predicated region
      $region41: #{tpu_custom_call.1} parent=5 // pred_check
        %p264 = pneg %p263
      $region42: #{tpu_custom_call.1} parent=5 // pred_check_branch
        %266 = sbr.rel (%p264) target = $region44
      $region43: #{tpu_custom_call.1} parent=5 // pred_region
        %s267 = ssub.s32 %s15, 2
        // Predicated region
        $region45: #{tpu_custom_call.1} parent=43 // pred_check
          %p268 = pneg %p128
        $region46: #{tpu_custom_call.1} parent=43 // pred_check_branch
          %270 = sbr.rel (%p268) target = $region48
        $region47: #{tpu_custom_call.1} parent=43 // pred_region
          %s271 = sand.u32 %s113, 1
          %s272 = scalar_lea.sflag [#allocation4], %s271
          %s273 = sand.u32 %s113, 1
          %s274 = smul.addr %s273, 8
          %s275 = scalar_lea.vmem [#allocation5], %s274
          %277 = dma.done %s272, 128
        $region48: #{tpu_custom_call.1} parent=43 // pred_fallthru
          _
      $region44: #{tpu_custom_call.1} parent=5 // pred_fallthru
        _
    $region6: #{tpu_custom_call.1} parent=1 // loop_footer
      %s19 = sadd.s32 1, %s15
    $region7: #{tpu_custom_call.1} parent=1 // loop_footer_branch
      %14 = sbr.rel target = $region3
    $region8: #{tpu_custom_call.1} parent=1 // loop_exit
      _
    %278 = vsyncpa [#allocation3], 1
    %s279 = scalar_lea.sflag [#allocation3], 1
    %280 = vsyncpa %s279, 1
    %281 = vsyncpa [#allocation4], 1
    %s282 = scalar_lea.sflag [#allocation4], 1
    %283 = vsyncpa %s282, 1

</llo_original>
